<compile_context>
chip_gen: v6e
topology: v6e:2x2x1
jax: 0.10.0
libtpu: 0.0.40
codegen_flags: <defaults>
</compile_context>

<pallas_src>
import functools

import jax
import jax.numpy as jnp
from jax.experimental import pallas as pl
from jax.experimental.pallas import tpu as pltpu


def _round_up(x, m):
    return ((x + m - 1) // m) * m


def _bpr_partial_kernel(pos_ref, neg_ref, out_ref, *, batch_size, batch_tile):
    """One grid step: partial sum of -logsigmoid(pos - neg) over a batch tile.

    The 1/K mean scaling happens once in the wrapper.  Rows past `batch_size`
    (tail-tile padding) are masked so they contribute exactly zero.
    """
    pos = pos_ref[...].astype(jnp.float32)                      # (TB, 1)
    neg = neg_ref[...].astype(jnp.float32)                      # (TB, K)

    # Row-validity mask for the (possibly partial) tail tile.
    row0 = pl.program_id(0) * batch_tile
    row_idx = row0 + jax.lax.broadcasted_iota(jnp.int32, pos.shape, 0)
    valid = row_idx < batch_size                                # (TB, 1)

    # x = pos - neg (broadcast pos across the K negatives, like expand_as).
    # Zero invalid rows *before* the transcendentals so padded garbage can
    # never produce inf/nan.
    x = jnp.where(valid, pos - neg, 0.0)                        # (TB, K)

    # Numerically stable logsigmoid(x) = min(x, 0) - log1p(exp(-|x|)).
    logsig = jnp.minimum(x, 0.0) - jnp.log1p(jnp.exp(-jnp.abs(x)))

    # Masked rows would otherwise give -logsigmoid(0) = log(2); re-mask to 0.
    contrib = jnp.where(valid, -logsig, 0.0)                    # (TB, K)

    # One lane reduce + tiny sublane reduce -> (1, 1) partial for this chunk.
    psum = jnp.sum(jnp.sum(contrib, axis=1, keepdims=True),
                   axis=0, keepdims=True)                       # (1, 1)

    # Write a full aligned (8, 128) block (unmasked vst); wrapper reads [0, 0].
    out_ref[...] = jnp.broadcast_to(psum, out_ref.shape)


def bpr_loss_pallas(pos_score, neg_score, *, batch_tile=512,
                    vmem_budget_bytes=16 * 1024 * 1024):
    """BaseRec.get_loss: pos (B,1), neg (B,K) (f32 or bf16) -> f32 scalar."""
    B, K = neg_score.shape
    assert pos_score.shape == (B, 1)

    # Budget the batch tile against double-buffered VMEM input blocks
    # (the (TB, 1) pos block is lane-padded to 128 in VMEM).  Keeps the kernel
    # safe on v7x's smaller VMEM while using the largest practical tile.
    bytes_per_row = 2 * 4 * (_round_up(K, 128) + 128)   # 2 buffers, f32 blocks
    max_tile = max(8, (vmem_budget_bytes // bytes_per_row) // 8 * 8)
    tile = max(8, min(_round_up(batch_tile, 8), max_tile, _round_up(B, 8)))

    num_chunks = pl.cdiv(B, tile)

    kernel = functools.partial(_bpr_partial_kernel,
                               batch_size=B, batch_tile=tile)

    partials = pl.pallas_call(
        kernel,
        out_shape=jax.ShapeDtypeStruct((num_chunks * 8, 128), jnp.float32),
        grid=(num_chunks,),
        in_specs=[
            pl.BlockSpec((tile, 1), lambda i: (i, 0)),   # pos_score tile
            pl.BlockSpec((tile, K), lambda i: (i, 0)),   # neg_score tile
        ],
        # Each chunk owns its own aligned (8,128) output block, so the grid
        # axis is truly data-parallel (megacore-shardable on v7x).
        out_specs=pl.BlockSpec((8, 128), lambda i: (i, 0)),
        compiler_params=pltpu.CompilerParams(
            dimension_semantics=("parallel",)),
    )(pos_score, neg_score)

    # Per-chunk partial sums live at rows 8*i, lane 0; apply mean-over-K once.
    return jnp.sum(partials[0::8, 0]) * (1.0 / K)


def bpr_loss_ref(pos_score, neg_score):
    x = pos_score.astype(jnp.float32) - neg_score.astype(jnp.float32)
    logsig = jnp.minimum(x, 0.0) - jnp.log1p(jnp.exp(-jnp.abs(x)))
    return jnp.sum(jnp.mean(-logsig, axis=1))


if __name__ == "__main__":
    # Deterministic synthetic "dataset" state mirroring BaseRec.__init__.
    num_users, num_items = 32, 64
    user_list = jnp.arange(num_users, dtype=jnp.int32)   # self.user_list
    item_list = jnp.arange(num_items, dtype=jnp.int32)   # self.item_list

    # Synthetic model output (what a concrete subclass' forward() would
    # return): (pos_score, neg_score) for a BPR training batch.  B is chosen
    # NOT to be a multiple of the tile so the tail-masking path is exercised.
    B, K = 200, 128
    key = jax.random.PRNGKey(0)
    k_pos, k_neg = jax.random.split(key)
    pos_score = jax.random.normal(k_pos, (B, 1), dtype=jnp.float32)
    neg_score = jax.random.normal(k_neg, (B, K), dtype=jnp.float32)

    loss_fn = jax.jit(functools.partial(bpr_loss_pallas, batch_tile=64))
    loss = jax.block_until_ready(loss_fn(pos_score, neg_score))

    ref = bpr_loss_ref(pos_score, neg_score)
    assert jnp.allclose(loss, ref, rtol=1e-5, atol=1e-4), (loss, ref)

    # bf16 scores (typical recsys forward dtype) also accepted; compute is f32.
    loss_bf16 = jax.block_until_ready(
        loss_fn(pos_score.astype(jnp.bfloat16), neg_score.astype(jnp.bfloat16)))
    ref_bf16 = bpr_loss_ref(pos_score.astype(jnp.bfloat16),
                            neg_score.astype(jnp.bfloat16))
    assert jnp.allclose(loss_bf16, ref_bf16, rtol=1e-4, atol=1e-3), (
        loss_bf16, ref_bf16)

    # TODO(synk): forward / forward_multi_items / get_*_ratings raise
    # NotImplementedError in the reference BaseRec, so there is nothing to lower.
    print("KERNEL_OK")
</pallas_src>

<mosaic_0001>
module attributes {stable_mosaic.version = 11 : i64} {
  func.func @_bpr_partial_kernel(%arg0: i32, %arg1: memref<64x1xf32, #tpu.memory_space<vmem>>, %arg2: memref<64x128xf32, #tpu.memory_space<vmem>>, %arg3: memref<8x128xf32, #tpu.memory_space<vmem>>) attributes {dimension_semantics = [#tpu.dimension_semantics<parallel>], iteration_bounds = array<i64: 4>, scalar_prefetch = 0 : i64, scratch_operands = 0 : i64, tpu.core_type = #tpu.core_type<tc>, window_params = [{transform_indices = @transform_0, window_bounds = array<i64: 64, 1>}, {transform_indices = @transform_1, window_bounds = array<i64: 64, 128>}, {transform_indices = @transform_2, window_bounds = array<i64: 8, 128>}]} {
    %c0 = arith.constant 0 : index
    %c0_0 = arith.constant 0 : index
    %0 = vector.load %arg1[%c0, %c0_0] : memref<64x1xf32, #tpu.memory_space<vmem>>, vector<64x1xf32>
    %c0_1 = arith.constant 0 : index
    %c0_2 = arith.constant 0 : index
    %1 = vector.load %arg2[%c0_1, %c0_2] : memref<64x128xf32, #tpu.memory_space<vmem>>, vector<64x128xf32>
    %c64_i32 = arith.constant 64 : i32
    %2 = arith.muli %arg0, %c64_i32 : i32
    %3 = tpu.iota {dimensions = array<i32: 0>} : vector<64x1xi32>
    %4 = vector.broadcast %2 : i32 to vector<64x1xi32>
    %5 = arith.addi %4, %3 : vector<64x1xi32>
    %c200_i32 = arith.constant 200 : i32
    %6 = vector.broadcast %c200_i32 : i32 to vector<64x1xi32>
    %7 = arith.cmpi slt, %5, %6 : vector<64x1xi32>
    %8 = vector.broadcast %0 : vector<64x1xf32> to vector<64x128xf32>
    %9 = arith.subf %8, %1 : vector<64x128xf32>
    %cst = arith.constant 0.000000e+00 : f32
    %10 = vector.shape_cast %7 : vector<64x1xi1> to vector<64x1xi1>
    %11 = vector.broadcast %10 : vector<64x1xi1> to vector<64x128xi1>
    %12 = vector.broadcast %cst : f32 to vector<64x128xf32>
    %13 = arith.select %11, %9, %12 : vector<64x128xi1>, vector<64x128xf32>
    %cst_3 = arith.constant 0.000000e+00 : f32
    %14 = vector.broadcast %cst_3 : f32 to vector<64x128xf32>
    %15 = arith.minimumf %13, %14 : vector<64x128xf32>
    %16 = math.absf %13 : vector<64x128xf32>
    %cst_4 = arith.constant 0.000000e+00 : f32
    %17 = vector.broadcast %cst_4 : f32 to vector<64x128xf32>
    %18 = arith.subf %17, %16 : vector<64x128xf32>
    %19 = math.exp %18 : vector<64x128xf32>
    %20 = math.log1p %19 : vector<64x128xf32>
    %21 = arith.subf %15, %20 : vector<64x128xf32>
    %cst_5 = arith.constant 0.000000e+00 : f32
    %22 = vector.broadcast %cst_5 : f32 to vector<64x128xf32>
    %23 = arith.subf %22, %21 : vector<64x128xf32>
    %cst_6 = arith.constant 0.000000e+00 : f32
    %24 = vector.shape_cast %7 : vector<64x1xi1> to vector<64x1xi1>
    %25 = vector.broadcast %24 : vector<64x1xi1> to vector<64x128xi1>
    %26 = vector.broadcast %cst_6 : f32 to vector<64x128xf32>
    %27 = arith.select %25, %23, %26 : vector<64x128xi1>, vector<64x128xf32>
    %cst_7 = arith.constant dense<0.000000e+00> : vector<64xf32>
    %28 = vector.multi_reduction <add>, %27, %cst_7 [1] : vector<64x128xf32> to vector<64xf32>
    %29 = vector.shape_cast %28 : vector<64xf32> to vector<64x1xf32>
    %cst_8 = arith.constant dense<0.000000e+00> : vector<1xf32>
    %30 = vector.multi_reduction <add>, %29, %cst_8 [0] : vector<64x1xf32> to vector<1xf32>
    %31 = vector.shape_cast %30 : vector<1xf32> to vector<1x1xf32>
    %32 = vector.shape_cast %31 : vector<1x1xf32> to vector<1x1xf32>
    %33 = vector.broadcast %32 : vector<1x1xf32> to vector<8x128xf32>
    %c0_9 = arith.constant 0 : index
    %c0_10 = arith.constant 0 : index
    %34 = vector.load %arg3[%c0_9, %c0_10] : memref<8x128xf32, #tpu.memory_space<vmem>>, vector<8x128xf32>
    tpu.vector_store %arg3[%c0_9, %c0_10], %33 {strides = array<i32>} : memref<8x128xf32, #tpu.memory_space<vmem>>, vector<8x128xf32>,
    return
  }
  func.func @transform_0(%arg0: i32) -> (i32, i32) {
    %c0_i32 = arith.constant 0 : i32
    %c0_i32_0 = arith.constant 0 : i32
    return %arg0, %c0_i32 : i32, i32
  }
  func.func @transform_1(%arg0: i32) -> (i32, i32) {
    %c0_i32 = arith.constant 0 : i32
    %c0_i32_0 = arith.constant 0 : i32
    return %arg0, %c0_i32 : i32, i32
  }
  func.func @transform_2(%arg0: i32) -> (i32, i32) {
    %c0_i32 = arith.constant 0 : i32
    %c0_i32_0 = arith.constant 0 : i32
    return %arg0, %c0_i32 : i32, i32
  }
}

</mosaic_0001>

<llo_original>
// kernel: bpr_loss_pallas.1
$region0: #{bpr_loss_pallas.1}
  #allocation0 [shape = 'u32[]', space=smem, size = 0x4, offset = 0x4, fixed_abs, tag = 'smem constant byte address 0x4 - core index']
  #allocation1 [shape = 'u32[144,128]{1,0:T(1,128)}', space=vmem, size = 0x12000, scoped, tag = 'internal scratch']
  %s0 = inlined_call_operand.vmem [shape: f32[200,1], index: 0, kind: input, shape index: {}]
  %s1 = inlined_call_operand.vmem [shape: f32[200,128], index: 1, kind: input, shape index: {}]
  %s2 = inlined_call_operand.vmem [shape: f32[32,128], index: 2, kind: output, shape index: {}]
  %s3 = sld [smem:[#allocation0]]
  $region41: #{bpr_loss_pallas.1} parent=0
    _
  %s5 = ssub.s32 1, %s3
  %s6 = scalar_select 0, %s5, %s3
  loop: start=0, step=1, limit=6
  $region2: #{bpr_loss_pallas.1} parent=0 // loop_pre_header
    _
  $region3: #{bpr_loss_pallas.1} parent=0 // loop_header
    %s8 = sphi 0, %s12
    %p9 = scmp.ge.s32.totalorder %s8, 6
    %s18 = sphi 0, %s20
    %s21 = sphi 0, %s18
    %s22 = sphi 0, %s21
    %s38 = sphi 0, %s22
    %s44 = sphi 0, %s46
    %s47 = sphi 0, %s44
    %s48 = sphi 0, %s47
    %s64 = sphi 0, %s48
    %s70 = sphi 0, %s72
    %s73 = sphi 0, %s70
    %s74 = sphi 0, %s73
    %s90 = sphi 0, %s74
  $region4: #{bpr_loss_pallas.1} parent=0 // loop_header_branch
    %11 = sbr.rel (%p9) target = $region8
  $region5: #{bpr_loss_pallas.1} parent=0 // loop_body
    %s13 = ssub.s32 %s8, 1
    %s14 = ssub.s32 %s8, 2
    %s15 = sadd.s32 %s8, 1
    %s16 = ssub.s32 %s8, %s15
    %p17 = scmp.eq.s32.totalorder %s16, 0
    %s19 = sadd.s32 %s18, 1
    %s20 = scalar_select %p17, %s18, %s19
    %p23 = pneg %p17
    %p24 = scmp.eq.s32.totalorder %s8, 3
    %p25 = por %p23, %p24
    %p26 = scmp.ne.s32.totalorder %s18, %s21
    %p27 = scmp.eq.s32.totalorder %s8, 0
    %p28 = por %p26, %p27
    %p29 = scmp.ne.s32.totalorder %s18, %s21
    %p30 = scmp.eq.s32.totalorder %s13, 3
    %p31 = por %p29, %p30
    %p32 = scmp.ne.s32.totalorder %s21, %s22
    %p33 = scmp.eq.s32.totalorder %s13, 0
    %p34 = por %p32, %p33
    %p35 = scmp.ne.s32.totalorder %s21, %s22
    %p36 = scmp.eq.s32.totalorder %s14, 3
    %p37 = por %p35, %p36
    %p39 = scmp.ne.s32.totalorder %s22, %s38
    %p40 = scmp.eq.s32.totalorder %s14, 0
    %p41 = por %p39, %p40
    %s42 = ssub.s32 %s8, %s15
    %p43 = scmp.eq.s32.totalorder %s42, 0
    %s45 = sadd.s32 %s44, 1
    %s46 = scalar_select %p43, %s44, %s45
    %p49 = pneg %p43
    %p50 = scmp.eq.s32.totalorder %s8, 3
    %p51 = por %p49, %p50
    %p52 = scmp.ne.s32.totalorder %s44, %s47
    %p53 = scmp.eq.s32.totalorder %s8, 0
    %p54 = por %p52, %p53
    %p55 = scmp.ne.s32.totalorder %s44, %s47
    %p56 = scmp.eq.s32.totalorder %s13, 3
    %p57 = por %p55, %p56
    %p58 = scmp.ne.s32.totalorder %s47, %s48
    %p59 = scmp.eq.s32.totalorder %s13, 0
    %p60 = por %p58, %p59
    %p61 = scmp.ne.s32.totalorder %s47, %s48
    %p62 = scmp.eq.s32.totalorder %s14, 3
    %p63 = por %p61, %p62
    %p65 = scmp.ne.s32.totalorder %s48, %s64
    %p66 = scmp.eq.s32.totalorder %s14, 0
    %p67 = por %p65, %p66
    %s68 = ssub.s32 %s8, %s15
    %p69 = scmp.eq.s32.totalorder %s68, 0
    %s71 = sadd.s32 %s70, 1
    %s72 = scalar_select %p69, %s70, %s71
    %p75 = pneg %p69
    %p76 = scmp.eq.s32.totalorder %s8, 3
    %p77 = por %p75, %p76
    %p78 = scmp.ne.s32.totalorder %s70, %s73
    %p79 = scmp.eq.s32.totalorder %s8, 0
    %p80 = por %p78, %p79
    %p81 = scmp.ne.s32.totalorder %s70, %s73
    %p82 = scmp.eq.s32.totalorder %s13, 3
    %p83 = por %p81, %p82
    %p84 = scmp.ne.s32.totalorder %s73, %s74
    %p85 = scmp.eq.s32.totalorder %s13, 0
    %p86 = por %p84, %p85
    %p87 = scmp.ne.s32.totalorder %s73, %s74
    %p88 = scmp.eq.s32.totalorder %s14, 3
    %p89 = por %p87, %p88
    %p91 = scmp.ne.s32.totalorder %s74, %s90
    %p92 = scmp.eq.s32.totalorder %s14, 0
    %p93 = por %p91, %p92
    %p94 = scmp.le.s32.totalorder 1, %s8
    %p95 = scmp.lt.s32.totalorder %s8, 5
    %p96 = pnand %p94, %p95
    %p97 = pneg %p96
    // Predicated region
    $region9: #{bpr_loss_pallas.1} parent=5 // pred_check
      _
    $region10: #{bpr_loss_pallas.1} parent=5 // pred_check_branch
      %99 = sbr.rel (%p96) target = $region12
    $region11: #{bpr_loss_pallas.1} parent=5 // pred_region
      %s100 = ssub.s32 %s8, 1
    $region12: #{bpr_loss_pallas.1} parent=5 // pred_fallthru
      _
    %p101 = scmp.lt.s32.totalorder %s8, 4
    // Predicated region
    $region13: #{bpr_loss_pallas.1} parent=5 // pred_check
      %p102 = pneg %p101
    $region14: #{bpr_loss_pallas.1} parent=5 // pred_check_branch
      %104 = sbr.rel (%p102) target = $region16
    $region15: #{bpr_loss_pallas.1} parent=5 // pred_region
      // Predicated region
      $region17: #{bpr_loss_pallas.1} parent=15 // pred_check
        %p105 = pneg %p28
      $region18: #{bpr_loss_pallas.1} parent=15 // pred_check_branch
        %107 = sbr.rel (%p105) target = $region20
      $region19: #{bpr_loss_pallas.1} parent=15 // pred_region
        %s108 = smul.u32 8, %s8
        %s109 = ssub.s32 25, %s108
        %p110 = scmp.lt.s32.totalorder %s109, 8
        %s111 = scalar_select %p110, %s109, 8
        %s112 = smul.u32 128, %s111
        %p113 = scmp.lt.s32.totalorder %s108, 24
        %s114 = scalar_select %p113, %s108, 24
        %s115 = smul.addr %s114, 8
        %s116 = scalar_lea.vmem %s0, %s115
        %s117 = smul.u32 8, %s8
        %s118 = ssub.s32 25, %s117
        %p119 = scmp.lt.s32.totalorder %s118, 8
        %s120 = scalar_select %p119, %s118, 8
        %s121 = smul.u32 128, %s120
      $region20: #{bpr_loss_pallas.1} parent=15 // pred_fallthru
        _
      // Predicated region
      $region21: #{bpr_loss_pallas.1} parent=15 // pred_check
        %p122 = pneg %p54
      $region22: #{bpr_loss_pallas.1} parent=15 // pred_check_branch
        %124 = sbr.rel (%p122) target = $region24
      $region23: #{bpr_loss_pallas.1} parent=15 // pred_region
        %s125 = smul.u32 8, %s8
        %s126 = ssub.s32 25, %s125
        %p127 = scmp.lt.s32.totalorder %s126, 8
        %s128 = scalar_select %p127, %s126, 8
        %s129 = smul.u32 128, %s128
        %p130 = scmp.lt.s32.totalorder %s125, 24
        %s131 = scalar_select %p130, %s125, 24
        %s132 = smul.addr %s131, 8
        %s133 = scalar_lea.vmem %s1, %s132
        %s134 = smul.u32 8, %s8
        %s135 = ssub.s32 25, %s134
        %p136 = scmp.lt.s32.totalorder %s135, 8
        %s137 = scalar_select %p136, %s135, 8
        %s138 = smul.u32 128, %s137
      $region24: #{bpr_loss_pallas.1} parent=15 // pred_fallthru
        _
    $region16: #{bpr_loss_pallas.1} parent=5 // pred_fallthru
      _
    %p139 = scmp.le.s32.totalorder 1, %s8
    %p140 = scmp.lt.s32.totalorder %s8, 5
    %p141 = pnand %p139, %p140
    %p142 = pneg %p141
    // Predicated region
    $region25: #{bpr_loss_pallas.1} parent=5 // pred_check
      _
    $region26: #{bpr_loss_pallas.1} parent=5 // pred_check_branch
      %144 = sbr.rel (%p141) target = $region28
    $region27: #{bpr_loss_pallas.1} parent=5 // pred_region
      %s145 = ssub.s32 %s8, 1
      %s146 = smul.u32 8, %s13
      %s147 = ssub.s32 25, %s146
      %p148 = scmp.lt.s32.totalorder %s147, 8
      %s149 = scalar_select %p148, %s147, 8
      %s150 = smul.u32 128, %s149
      %p151 = scmp.lt.s32.totalorder %s146, 24
      %s152 = scalar_select %p151, %s146, 24
      %s153 = smul.addr %s152, 8
      %s154 = scalar_lea.vmem %s0, %s153
      %p155 = pneg %p34
      %p156 = pneg %p31
      %s157 = smul.u32 8, %s13
      %s158 = ssub.s32 25, %s157
      %p159 = scmp.lt.s32.totalorder %s158, 8
      %s160 = scalar_select %p159, %s158, 8
      %s161 = smul.u32 128, %s160
      %p162 = scmp.lt.s32.totalorder %s157, 24
      %s163 = scalar_select %p162, %s157, 24
      %s164 = smul.addr %s163, 8
      %s165 = scalar_lea.vmem %s1, %s164
      %p166 = pneg %p60
      %p167 = pneg %p57
      %p168 = pneg %p86
      %p169 = pneg %p83
      %p170 = scmp.lt.s32.totalorder %s13, 3
      %s171 = scalar_select %p170, %s13, 3
      %s172 = smul.addr %s171, 8
      %s173 = scalar_lea.vmem %s2, %s172
      %s174 = smul.u32 8, %s13
      %s175 = ssub.s32 25, %s174
      %p176 = scmp.lt.s32.totalorder %s175, 8
      %s177 = scalar_select %p176, %s175, 8
      %s178 = smul.u32 128, %s177
      %p179 = scmp.lt.s32.totalorder %s174, 24
      %s180 = scalar_select %p179, %s174, 24
      %s181 = smul.addr %s180, 8
      %s182 = scalar_lea.vmem %s0, %s181
      %s183 = smul.u32 8, %s13
      %s184 = ssub.s32 25, %s183
      %p185 = scmp.lt.s32.totalorder %s184, 8
      %s186 = scalar_select %p185, %s184, 8
      %s187 = smul.u32 128, %s186
      %s188 = smul.u32 8, %s13
      %s189 = ssub.s32 25, %s188
      %p190 = scmp.lt.s32.totalorder %s189, 8
      %s191 = scalar_select %p190, %s189, 8
      %s192 = smul.u32 128, %s191
      %p193 = scmp.lt.s32.totalorder %s188, 24
      %s194 = scalar_select %p193, %s188, 24
      %s195 = smul.addr %s194, 8
      %s196 = scalar_lea.vmem %s1, %s195
      %s197 = smul.u32 8, %s13
      %s198 = ssub.s32 25, %s197
      %p199 = scmp.lt.s32.totalorder %s198, 8
      %s200 = scalar_select %p199, %s198, 8
      %s201 = smul.u32 128, %s200
      %p202 = scmp.lt.s32.totalorder %s13, 3
      %s203 = scalar_select %p202, %s13, 3
      %s204 = smul.addr %s203, 8
      %s205 = scalar_lea.vmem %s2, %s204
      %v206 = vld [vmem:[%s182] sm:$0xff]
      %v207 = vld [vmem:[%s182 + $0x8] sm:$0xff]
      %v208 = vld [vmem:[%s182 + $0x10] sm:$0xff]
      %v209 = vld [vmem:[%s182 + $0x18] sm:$0xff]
      %v210 = vld [vmem:[%s182 + $0x20] sm:$0xff]
      %v211 = vld [vmem:[%s182 + $0x28] sm:$0xff]
      %v212 = vld [vmem:[%s182 + $0x30] sm:$0xff]
      %v213 = vld [vmem:[%s182 + $0x38] sm:$0xff]
      %v214 = vld [vmem:[%s196] sm:$0xff]
      %v215 = vld [vmem:[%s196 + $0x8] sm:$0xff]
      %v216 = vld [vmem:[%s196 + $0x10] sm:$0xff]
      %v217 = vld [vmem:[%s196 + $0x18] sm:$0xff]
      %v218 = vld [vmem:[%s196 + $0x20] sm:$0xff]
      %v219 = vld [vmem:[%s196 + $0x28] sm:$0xff]
      %v220 = vld [vmem:[%s196 + $0x30] sm:$0xff]
      %v221 = vld [vmem:[%s196 + $0x38] sm:$0xff]
      %s222 = smul.u32 %s13, 64
      %v223 = vlaneseq
      %v224 = vshrl.u32 %v223, 7
      %v225 = vadd.s32 %v224, 8
      %v226 = vadd.s32 %v224, 16
      %v227 = vadd.s32 %v224, 24
      %v228 = vadd.s32 %v224, 32
      %v229 = vadd.s32 %v224, 40
      %v230 = vadd.s32 %v224, 48
      %v231 = vadd.s32 %v224, 56
      %v232 = vstv %s222
      %v233 = vadd.s32 %v232, %v224
      %v234 = vadd.s32 %v232, %v225
      %v235 = vadd.s32 %v232, %v226
      %v236 = vadd.s32 %v232, %v227
      %v237 = vadd.s32 %v232, %v228
      %v238 = vadd.s32 %v232, %v229
      %v239 = vadd.s32 %v232, %v230
      %v240 = vadd.s32 %v232, %v231
      %vm241 = vcmp.lt.s32.totalorder %v233, 200
      %vm242 = vcmp.lt.s32.totalorder %v234, 200
      %vm243 = vcmp.lt.s32.totalorder %v235, 200
      %vm244 = vcmp.lt.s32.totalorder %v236, 200
      %vm245 = vcmp.lt.s32.totalorder %v237, 200
      %vm246 = vcmp.lt.s32.totalorder %v238, 200
      %vm247 = vcmp.lt.s32.totalorder %v239, 200
      %vm248 = vcmp.lt.s32.totalorder %v240, 200
      %250 = vset.pattern.permute.xlu0 0
      %251 = vperm.xlu0 %250, %v206
      %v252 = vpop.permute.xlu0 %251
      %255 = vset.pattern.permute.xlu0 0
      %256 = vperm.xlu0 %255, %v207
      %v257 = vpop.permute.xlu0 %256
      %260 = vset.pattern.permute.xlu0 0
      %261 = vperm.xlu0 %260, %v208
      %v262 = vpop.permute.xlu0 %261
      %265 = vset.pattern.permute.xlu0 0
      %266 = vperm.xlu0 %265, %v209
      %v267 = vpop.permute.xlu0 %266
      %270 = vset.pattern.permute.xlu0 0
      %271 = vperm.xlu0 %270, %v210
      %v272 = vpop.permute.xlu0 %271
      %275 = vset.pattern.permute.xlu0 0
      %276 = vperm.xlu0 %275, %v211
      %v277 = vpop.permute.xlu0 %276
      %280 = vset.pattern.permute.xlu0 0
      %281 = vperm.xlu0 %280, %v212
      %v282 = vpop.permute.xlu0 %281
      %285 = vset.pattern.permute.xlu0 0
      %286 = vperm.xlu0 %285, %v213
      %v287 = vpop.permute.xlu0 %286
      %v289 = vsub.f32 %v252, %v214
      %v290 = vsub.f32 %v257, %v215
      %v291 = vsub.f32 %v262, %v216
      %v292 = vsub.f32 %v267, %v217
      %v293 = vsub.f32 %v272, %v218
      %v294 = vsub.f32 %v277, %v219
      %v295 = vsub.f32 %v282, %v220
      %v296 = vsub.f32 %v287, %v221
      %v297 = vsel %vm241, 1, 0
      %v298 = vsel %vm242, 1, 0
      %v299 = vsel %vm243, 1, 0
      %v300 = vsel %vm244, 1, 0
      %v301 = vsel %vm245, 1, 0
      %v302 = vsel %vm246, 1, 0
      %v303 = vsel %vm247, 1, 0
      %v304 = vsel %vm248, 1, 0
      %vm305 = vcmp.eq.s32.totalorder %v297, 1
      %vm306 = vcmp.eq.s32.totalorder %v298, 1
      %vm307 = vcmp.eq.s32.totalorder %v299, 1
      %vm308 = vcmp.eq.s32.totalorder %v300, 1
      %vm309 = vcmp.eq.s32.totalorder %v301, 1
      %vm310 = vcmp.eq.s32.totalorder %v302, 1
      %vm311 = vcmp.eq.s32.totalorder %v303, 1
      %vm312 = vcmp.eq.s32.totalorder %v304, 1
      %v313 = vsel %vm305, %v289, 0.0
      %v314 = vsel %vm306, %v290, 0.0
      %v315 = vsel %vm307, %v291, 0.0
      %v316 = vsel %vm308, %v292, 0.0
      %v317 = vsel %vm309, %v293, 0.0
      %v318 = vsel %vm310, %v294, 0.0
      %v319 = vsel %vm311, %v295, 0.0
      %v320 = vsel %vm312, %v296, 0.0
      %v321 = vmin.f32 %v313, 0.0
      %v322 = vmin.f32 %v314, 0.0
      %v323 = vmin.f32 %v315, 0.0
      %v324 = vmin.f32 %v316, 0.0
      %v325 = vmin.f32 %v317, 0.0
      %v326 = vmin.f32 %v318, 0.0
      %v327 = vmin.f32 %v319, 0.0
      %v328 = vmin.f32 %v320, 0.0
      %v329 = vand.u32 2147483647, %v313
      %v330 = vand.u32 2147483647, %v314
      %v331 = vand.u32 2147483647, %v315
      %v332 = vand.u32 2147483647, %v316
      %v333 = vand.u32 2147483647, %v317
      %v334 = vand.u32 2147483647, %v318
      %v335 = vand.u32 2147483647, %v319
      %v336 = vand.u32 2147483647, %v320
      %v337 = vsub.f32 0.0, %v329
      %v338 = vsub.f32 0.0, %v330
      %v339 = vsub.f32 0.0, %v331
      %v340 = vsub.f32 0.0, %v332
      %v341 = vsub.f32 0.0, %v333
      %v342 = vsub.f32 0.0, %v334
      %v343 = vsub.f32 0.0, %v335
      %v344 = vsub.f32 0.0, %v336
      %v345 = vmul.f32 %v337, 1.442695
      %v346 = vpow.pop %v345
      %v347 = vmul.f32 %v338, 1.442695
      %v348 = vpow.pop %v347
      %v349 = vmul.f32 %v339, 1.442695
      %v350 = vpow.pop %v349
      %v351 = vmul.f32 %v340, 1.442695
      %v352 = vpow.pop %v351
      %v353 = vmul.f32 %v341, 1.442695
      %v354 = vpow.pop %v353
      %v355 = vmul.f32 %v342, 1.442695
      %v356 = vpow.pop %v355
      %v357 = vmul.f32 %v343, 1.442695
      %v358 = vpow.pop %v357
      %v359 = vmul.f32 %v344, 1.442695
      %v360 = vpow.pop %v359
      %v361 = vadd.f32 %v346, 1.0
      %v362 = vlog2.pop %v361
      %v363 = vmul.f32 %v362, 0.6931472
      %v364 = vmul.f32 -0.5, %v346
      %v365 = vadd.f32 %v364, 1.0
      %v366 = vmul.f32 %v365, %v346
      %v367 = vand.u32 2147483647, %v346
      %vm368 = vcmp.lt.f32.partialorder %v367, 0.0004427343
      %v369 = vsel %vm368, %v366, %v363
      %v370 = vadd.f32 %v348, 1.0
      %v371 = vlog2.pop %v370
      %v372 = vmul.f32 %v371, 0.6931472
      %v373 = vmul.f32 -0.5, %v348
      %v374 = vadd.f32 %v373, 1.0
      %v375 = vmul.f32 %v374, %v348
      %v376 = vand.u32 2147483647, %v348
      %vm377 = vcmp.lt.f32.partialorder %v376, 0.0004427343
      %v378 = vsel %vm377, %v375, %v372
      %v379 = vadd.f32 %v350, 1.0
      %v380 = vlog2.pop %v379
      %v381 = vmul.f32 %v380, 0.6931472
      %v382 = vmul.f32 -0.5, %v350
      %v383 = vadd.f32 %v382, 1.0
      %v384 = vmul.f32 %v383, %v350
      %v385 = vand.u32 2147483647, %v350
      %vm386 = vcmp.lt.f32.partialorder %v385, 0.0004427343
      %v387 = vsel %vm386, %v384, %v381
      %v388 = vadd.f32 %v352, 1.0
      %v389 = vlog2.pop %v388
      %v390 = vmul.f32 %v389, 0.6931472
      %v391 = vmul.f32 -0.5, %v352
      %v392 = vadd.f32 %v391, 1.0
      %v393 = vmul.f32 %v392, %v352
      %v394 = vand.u32 2147483647, %v352
      %vm395 = vcmp.lt.f32.partialorder %v394, 0.0004427343
      %v396 = vsel %vm395, %v393, %v390
      %v397 = vadd.f32 %v354, 1.0
      %v398 = vlog2.pop %v397
      %v399 = vmul.f32 %v398, 0.6931472
      %v400 = vmul.f32 -0.5, %v354
      %v401 = vadd.f32 %v400, 1.0
      %v402 = vmul.f32 %v401, %v354
      %v403 = vand.u32 2147483647, %v354
      %vm404 = vcmp.lt.f32.partialorder %v403, 0.0004427343
      %v405 = vsel %vm404, %v402, %v399
      %v406 = vadd.f32 %v356, 1.0
      %v407 = vlog2.pop %v406
      %v408 = vmul.f32 %v407, 0.6931472
      %v409 = vmul.f32 -0.5, %v356
      %v410 = vadd.f32 %v409, 1.0
      %v411 = vmul.f32 %v410, %v356
      %v412 = vand.u32 2147483647, %v356
      %vm413 = vcmp.lt.f32.partialorder %v412, 0.0004427343
      %v414 = vsel %vm413, %v411, %v408
      %v415 = vadd.f32 %v358, 1.0
      %v416 = vlog2.pop %v415
      %v417 = vmul.f32 %v416, 0.6931472
      %v418 = vmul.f32 -0.5, %v358
      %v419 = vadd.f32 %v418, 1.0
      %v420 = vmul.f32 %v419, %v358
      %v421 = vand.u32 2147483647, %v358
      %vm422 = vcmp.lt.f32.partialorder %v421, 0.0004427343
      %v423 = vsel %vm422, %v420, %v417
      %v424 = vadd.f32 %v360, 1.0
      %v425 = vlog2.pop %v424
      %v426 = vmul.f32 %v425, 0.6931472
      %v427 = vmul.f32 -0.5, %v360
      %v428 = vadd.f32 %v427, 1.0
      %v429 = vmul.f32 %v428, %v360
      %v430 = vand.u32 2147483647, %v360
      %vm431 = vcmp.lt.f32.partialorder %v430, 0.0004427343
      %v432 = vsel %vm431, %v429, %v426
      %v433 = vsub.f32 %v321, %v369
      %v434 = vsub.f32 %v322, %v378
      %v435 = vsub.f32 %v323, %v387
      %v436 = vsub.f32 %v324, %v396
      %v437 = vsub.f32 %v325, %v405
      %v438 = vsub.f32 %v326, %v414
      %v439 = vsub.f32 %v327, %v423
      %v440 = vsub.f32 %v328, %v432
      %v441 = vsub.f32 0.0, %v433
      %v442 = vsub.f32 0.0, %v434
      %v443 = vsub.f32 0.0, %v435
      %v444 = vsub.f32 0.0, %v436
      %v445 = vsub.f32 0.0, %v437
      %v446 = vsub.f32 0.0, %v438
      %v447 = vsub.f32 0.0, %v439
      %v448 = vsub.f32 0.0, %v440
      %v449 = vsel %vm305, %v441, 0.0
      %v450 = vsel %vm306, %v442, 0.0
      %v451 = vsel %vm307, %v443, 0.0
      %v452 = vsel %vm308, %v444, 0.0
      %v453 = vsel %vm309, %v445, 0.0
      %v454 = vsel %vm310, %v446, 0.0
      %v455 = vsel %vm311, %v447, 0.0
      %v456 = vsel %vm312, %v448, 0.0
      %457 = vadd.xlane.f32.xlu0 %v449
      %v458 = vpop.xlane.xlu0 %457
      %459 = vadd.xlane.f32.xlu0 %v450
      %v460 = vpop.xlane.xlu0 %459
      %461 = vadd.xlane.f32.xlu0 %v451
      %v462 = vpop.xlane.xlu0 %461
      %463 = vadd.xlane.f32.xlu0 %v452
      %v464 = vpop.xlane.xlu0 %463
      %465 = vadd.xlane.f32.xlu0 %v453
      %v466 = vpop.xlane.xlu0 %465
      %467 = vadd.xlane.f32.xlu0 %v454
      %v468 = vpop.xlane.xlu0 %467
      %469 = vadd.xlane.f32.xlu0 %v455
      %v470 = vpop.xlane.xlu0 %469
      %471 = vadd.xlane.f32.xlu0 %v456
      %v472 = vpop.xlane.xlu0 %471
      %v473 = vadd.f32 %v458, %v460
      %v474 = vadd.f32 %v473, %v462
      %v475 = vadd.f32 %v474, %v464
      %v476 = vadd.f32 %v475, %v466
      %v477 = vadd.f32 %v476, %v468
      %v478 = vadd.f32 %v477, %v470
      %v479 = vadd.f32 %v478, %v472
      %v480 = vrot.slane %v479, 4
      %v481 = vadd.f32 %v479, %v480
      %v482 = vrot.slane %v481, 2
      %v483 = vadd.f32 %v481, %v482
      %v484 = vrot.slane %v483, 1
      %v485 = vadd.f32 %v483, %v484
      %486 = vst [vmem:[%s205] sm:$0xff] %v485
      %p487 = scmp.lt.s32.totalorder %s13, 3
      %s488 = scalar_select %p487, %s13, 3
      %s489 = smul.addr %s488, 8
      %s490 = scalar_lea.vmem %s2, %s489
      // Predicated region
      $region29: #{bpr_loss_pallas.1} parent=27 // pred_check
        %p491 = pneg %p83
      $region30: #{bpr_loss_pallas.1} parent=27 // pred_check_branch
        %493 = sbr.rel (%p491) target = $region32
      $region31: #{bpr_loss_pallas.1} parent=27 // pred_region
        _
      $region32: #{bpr_loss_pallas.1} parent=27 // pred_fallthru
        _
    $region28: #{bpr_loss_pallas.1} parent=5 // pred_fallthru
      _
    %p494 = scmp.le.s32.totalorder 2, %s8
    // Predicated region
    $region33: #{bpr_loss_pallas.1} parent=5 // pred_check
      %p495 = pneg %p494
    $region34: #{bpr_loss_pallas.1} parent=5 // pred_check_branch
      %497 = sbr.rel (%p495) target = $region36
    $region35: #{bpr_loss_pallas.1} parent=5 // pred_region
      %s498 = ssub.s32 %s8, 2
      // Predicated region
      $region37: #{bpr_loss_pallas.1} parent=35 // pred_check
        %p499 = pneg %p89
      $region38: #{bpr_loss_pallas.1} parent=35 // pred_check_branch
        %501 = sbr.rel (%p499) target = $region40
      $region39: #{bpr_loss_pallas.1} parent=35 // pred_region
        %p502 = scmp.lt.s32.totalorder %s14, 3
        %s503 = scalar_select %p502, %s14, 3
        %s504 = smul.addr %s503, 8
        %s505 = scalar_lea.vmem %s2, %s504
      $region40: #{bpr_loss_pallas.1} parent=35 // pred_fallthru
        _
    $region36: #{bpr_loss_pallas.1} parent=5 // pred_fallthru
      _
  $region6: #{bpr_loss_pallas.1} parent=0 // loop_footer
    %s12 = sadd.s32 1, %s8
  $region7: #{bpr_loss_pallas.1} parent=0 // loop_footer_branch
    %7 = sbr.rel target = $region3
  $region8: #{bpr_loss_pallas.1} parent=0 // loop_exit
    _

</llo_original>
